<compile_context>
chip_gen: v7x
topology: tpu7x:2x2x1
jax: 0.10.0
libtpu: 0.0.40
codegen_flags: <defaults>
</compile_context>

<pallas_src>
import functools

import jax
import jax.numpy as jnp
import numpy as np
from jax.experimental import pallas as pl
from jax.experimental.pallas import tpu as pltpu


_LANES = 128


def _ceil_to(x, m):
    return ((x + m - 1) // m) * m


def _conv_bn_relu_kernel(x_ref, w_ref, b_ref, o_ref):
    # x_ref: (tm, K) bf16 im2col rows, K = 9*Cin (tap axis folded into contraction)
    # w_ref: (K, Cout_pad) bf16, BN scale pre-folded per output channel
    # b_ref: (1, Cout_pad) f32 folded bias ((conv_b - mean) * scale + beta)
    # o_ref: (tm, Cout_pad) f32, lane-dense (Cout padded to a 128 multiple)
    acc = jnp.dot(x_ref[...], w_ref[...], preferred_element_type=jnp.float32)
    o_ref[...] = jnp.maximum(acc + b_ref[...], 0.0).astype(o_ref.dtype)


def _choose_row_tiling(M, K, cout_pad):
    """Pick row-tile size tm (multiple of 128) and padded row count."""
    # Per-row VMEM cost of a double-buffered pipeline: bf16 input + f32 output.
    bytes_per_row = 2 * (K * 2 + cout_pad * 4)
    vmem_budget = 24 * 1024 * 1024          # conservative: fits v7x's 64 MiB VMEM
    tm_cap = max(_LANES, (vmem_budget // bytes_per_row) // _LANES * _LANES)
    tm = min(512, tm_cap)                   # 512-row tiles ~ HBM roofline territory
    if M <= 2 * tm:
        # Small problem: keep at least two row tiles so both v7x TCs get work.
        half = (M + 1) // 2
        tm = max(_LANES, _ceil_to(half, _LANES))
    m_pad = _ceil_to(M, tm)
    return tm, m_pad


def _pallas_conv_bn_relu(x_col, w_col, bias, *, tm):
    """x_col: (m_pad, K) bf16, w_col: (K, Cout_pad) bf16, bias: (1, Cout_pad) f32."""
    m_pad, K = x_col.shape
    cout_pad = w_col.shape[-1]
    assert m_pad % tm == 0, (m_pad, tm)

    grid = (m_pad // tm,)
    return pl.pallas_call(
        _conv_bn_relu_kernel,
        out_shape=jax.ShapeDtypeStruct((m_pad, cout_pad), jnp.float32),
        grid_spec=pltpu.PrefetchScalarGridSpec(
            num_scalar_prefetch=0,
            grid=grid,
            in_specs=[
                pl.BlockSpec((tm, K), lambda i: (i, 0)),
                pl.BlockSpec((K, cout_pad), lambda i: (0, 0)),
                pl.BlockSpec((1, cout_pad), lambda i: (0, 0)),
            ],
            out_specs=pl.BlockSpec((tm, cout_pad), lambda i: (i, 0)),
        ),
        compiler_params=pltpu.CompilerParams(
            dimension_semantics=("parallel",),
            vmem_limit_bytes=48 * 1024 * 1024,
        ),
    )(x_col, w_col, bias)


def basic_conv_forward(x_nchw, params, *, stride):
    """Forward pass of basic_conv.

    x_nchw: (N, Cin, H, W)  float32
    params: dict with conv_w (Cout,Cin,3,3), conv_b (Cout,), bn gamma/beta/mean/var
    returns (N, Cout, Ho, Wo) float32
    """
    conv_w = params["conv_w"]
    conv_b = params["conv_b"]
    gamma, beta = params["bn_gamma"], params["bn_beta"]
    mean, var = params["bn_mean"], params["bn_var"]
    eps = 1e-5

    N, Cin, H, W = x_nchw.shape
    Cout = conv_w.shape[0]
    s = stride
    Ho = (H + 2 - 3) // s + 1
    Wo = (W + 2 - 3) // s + 1

    # NCHW -> NHWC, zero-pad spatial dims by 1 (glue).
    x = jnp.transpose(x_nchw, (0, 2, 3, 1))
    xp = jnp.pad(x, ((0, 0), (1, 1), (1, 1), (0, 0)))

    # im2col: 9 shifted, strided taps stacked along channels -> (M, 9*Cin).
    # TODO(synk): generate the taps in-kernel from the padded NHWC array
    # (halo-tiled loads) to avoid materializing the 9x im2col expansion in HBM.
    taps = []
    for ky in range(3):
        for kx in range(3):
            taps.append(
                xp[:, ky: ky + (Ho - 1) * s + 1: s,
                      kx: kx + (Wo - 1) * s + 1: s, :]
            )
    M = N * Ho * Wo
    K = 9 * Cin
    x_col = jnp.concatenate(taps, axis=-1).reshape(M, K)

    # Fold conv bias + BatchNorm (inference) into the weights and a bias vector.
    inv_std = 1.0 / jnp.sqrt(var + eps)
    scale = gamma * inv_std                                      # (Cout,)
    bias = (conv_b - mean) * scale + beta                        # (Cout,)
    w_col = jnp.transpose(conv_w, (2, 3, 1, 0)).reshape(K, Cout) * scale[None, :]

    # Pad Cout to a lane-dense 128 multiple and rows to the tile size.
    cout_pad = _ceil_to(Cout, _LANES)
    tm, m_pad = _choose_row_tiling(M, K, cout_pad)

    x_col = jnp.pad(x_col, ((0, m_pad - M), (0, 0))).astype(jnp.bfloat16)
    w_col = jnp.pad(w_col, ((0, 0), (0, cout_pad - Cout))).astype(jnp.bfloat16)
    bias = jnp.pad(bias, (0, cout_pad - Cout)).reshape(1, cout_pad).astype(jnp.float32)

    out_flat = _pallas_conv_bn_relu(x_col, w_col, bias, tm=tm)

    # Slice off padding: (m_pad, Cout_pad) -> (N, Ho, Wo, Cout) -> NCHW.
    out = out_flat[:M, :Cout].reshape(N, Ho, Wo, Cout)
    return jnp.transpose(out, (0, 3, 1, 2))


def _reference_forward(x, params, *, stride):
    """Pure-JAX reference (f32) for a loose numerical sanity check."""
    eps = 1e-5
    y = jax.lax.conv_general_dilated(
        x, params["conv_w"], window_strides=(stride, stride),
        padding=((1, 1), (1, 1)),
        dimension_numbers=("NCHW", "OIHW", "NCHW"))
    y = y + params["conv_b"][None, :, None, None]
    inv_std = 1.0 / jnp.sqrt(params["bn_var"] + eps)
    y = (y - params["bn_mean"][None, :, None, None]) \
        * (params["bn_gamma"] * inv_std)[None, :, None, None] \
        + params["bn_beta"][None, :, None, None]
    return jnp.maximum(y, 0.0)


def init_params(key, in_ch, out_ch):
    k1, k2, k3, k4 = jax.random.split(key, 4)
    fan_in = in_ch * 3 * 3
    bound = 1.0 / jnp.sqrt(fan_in)
    return {
        "conv_w": jax.random.uniform(
            k1, (out_ch, in_ch, 3, 3), jnp.float32, -bound, bound
        ),
        "conv_b": jax.random.uniform(k2, (out_ch,), jnp.float32, -bound, bound),
        "bn_gamma": 1.0 + 0.1 * jax.random.normal(k3, (out_ch,), jnp.float32),
        "bn_beta": 0.1 * jax.random.normal(k4, (out_ch,), jnp.float32),
        # TODO(synk): BatchNorm implemented in inference mode (running stats);
        # PyTorch train-mode batch statistics are not computed here.
        "bn_mean": jnp.zeros((out_ch,), jnp.float32),
        "bn_var": jnp.ones((out_ch,), jnp.float32),
    }


if __name__ == "__main__":
    key = jax.random.PRNGKey(0)
    kx, kp = jax.random.split(key)

    N, Cin, H, W = 2, 4, 16, 16
    Cout, stride = 8, 1

    x = jax.random.normal(kx, (N, Cin, H, W), jnp.float32)
    params = init_params(kp, Cin, Cout)

    fwd = jax.jit(functools.partial(basic_conv_forward, stride=stride))
    out = jax.block_until_ready(fwd(x, params))

    assert out.shape == (N, Cout, H // stride, W // stride), out.shape
    assert bool(jnp.all(out >= 0.0))  # ReLU

    # Loose numerical check vs pure-JAX f32 reference (bf16 MXU inputs => relaxed tol).
    ref = _reference_forward(x, params, stride=stride)
    np.testing.assert_allclose(np.asarray(out), np.asarray(ref), atol=1e-1, rtol=1e-1)

    print("KERNEL_OK")
</pallas_src>

<mosaic_0001>
module attributes {stable_mosaic.version = 11 : i64} {
  func.func @_conv_bn_relu_kernel(%arg0: i32, %arg1: memref<256x36xbf16, #tpu.memory_space<vmem>>, %arg2: memref<36x128xbf16, #tpu.memory_space<vmem>>, %arg3: memref<1x128xf32, #tpu.memory_space<vmem>>, %arg4: memref<256x128xf32, #tpu.memory_space<vmem>>) attributes {dimension_semantics = [#tpu.dimension_semantics<parallel>], iteration_bounds = array<i64: 2>, scalar_prefetch = 0 : i64, scratch_operands = 0 : i64, tpu.core_type = #tpu.core_type<tc>, window_params = [{transform_indices = @transform_0, window_bounds = array<i64: 256, 36>}, {pipeline_mode = #tpu.pipeline_mode<synchronous>, transform_indices = @transform_1, window_bounds = array<i64: 36, 128>}, {pipeline_mode = #tpu.pipeline_mode<synchronous>, transform_indices = @transform_2, window_bounds = array<i64: 1, 128>}, {transform_indices = @transform_3, window_bounds = array<i64: 256, 128>}]} {
    %c0 = arith.constant 0 : index
    %c0_0 = arith.constant 0 : index
    %0 = vector.load %arg1[%c0, %c0_0] : memref<256x36xbf16, #tpu.memory_space<vmem>>, vector<256x36xbf16>
    %c0_1 = arith.constant 0 : index
    %c0_2 = arith.constant 0 : index
    %1 = vector.load %arg2[%c0_1, %c0_2] : memref<36x128xbf16, #tpu.memory_space<vmem>>, vector<36x128xbf16>
    %cst = arith.constant dense<0.000000e+00> : vector<256x128xf32>
    %2 = tpu.matmul %0, %1, %cst {dimension_numbers = #tpu.dot_dimension_numbers<[1], [0], [0], [1], [0, 0, 1, 1], [], []>} : vector<256x36xbf16>, vector<36x128xbf16>, vector<256x128xf32> -> vector<256x128xf32>
    %c0_3 = arith.constant 0 : index
    %c0_4 = arith.constant 0 : index
    %3 = vector.load %arg3[%c0_3, %c0_4] : memref<1x128xf32, #tpu.memory_space<vmem>>, vector<1x128xf32>
    %4 = vector.broadcast %3 : vector<1x128xf32> to vector<256x128xf32>
    %5 = arith.addf %2, %4 : vector<256x128xf32>
    %cst_5 = arith.constant 0.000000e+00 : f32
    %6 = vector.broadcast %cst_5 : f32 to vector<256x128xf32>
    %7 = arith.maximumf %5, %6 : vector<256x128xf32>
    %c0_6 = arith.constant 0 : index
    %c0_7 = arith.constant 0 : index
    %8 = vector.load %arg4[%c0_6, %c0_7] : memref<256x128xf32, #tpu.memory_space<vmem>>, vector<256x128xf32>
    tpu.vector_store %arg4[%c0_6, %c0_7], %7 {strides = array<i32>} : memref<256x128xf32, #tpu.memory_space<vmem>>, vector<256x128xf32>,
    return
  }
  func.func @transform_0(%arg0: i32) -> (i32, i32) {
    %c0_i32 = arith.constant 0 : i32
    %c0_i32_0 = arith.constant 0 : i32
    return %arg0, %c0_i32 : i32, i32
  }
  func.func @transform_1(%arg0: i32) -> (i32, i32) {
    %c0_i32 = arith.constant 0 : i32
    %c0_i32_0 = arith.constant 0 : i32
    %c0_i32_1 = arith.constant 0 : i32
    return %c0_i32, %c0_i32_0 : i32, i32
  }
  func.func @transform_2(%arg0: i32) -> (i32, i32) {
    %c0_i32 = arith.constant 0 : i32
    %c0_i32_0 = arith.constant 0 : i32
    %c0_i32_1 = arith.constant 0 : i32
    return %c0_i32, %c0_i32_0 : i32, i32
  }
  func.func @transform_3(%arg0: i32) -> (i32, i32) {
    %c0_i32 = arith.constant 0 : i32
    %c0_i32_0 = arith.constant 0 : i32
    return %arg0, %c0_i32 : i32, i32
  }
}

</mosaic_0001>

<llo_original>
// kernel: basic_conv_forward.1
$region0: #{basic_conv_forward.1}
  #allocation0 [shape = 'u32[]', space=smem, size = 0x4, offset = 0x4, fixed_abs, tag = 'smem constant byte address 0x4 - core index']
  #allocation1 [shape = 'u32[144,128]{1,0:T(1,128)}', space=vmem, size = 0x12000, scoped, tag = 'internal scratch']
  %s0 = inlined_call_operand.vmem [shape: bf16[512,36], index: 0, kind: input, shape index: {}]
  %s1 = inlined_call_operand.vmem [shape: bf16[36,128], index: 1, kind: input, shape index: {}]
  %s2 = inlined_call_operand.vmem [shape: f32[1,128], index: 2, kind: input, shape index: {}]
  %s3 = inlined_call_operand.vmem [shape: f32[512,128], index: 3, kind: output, shape index: {}]
  %s4 = sld [smem:[#allocation0]]
  $region45: #{basic_conv_forward.1} parent=0
    _
  %s6 = ssub.s32 1, %s4
  %s7 = scalar_select 0, %s6, %s4
  loop: start=0, step=1, limit=4
  $region2: #{basic_conv_forward.1} parent=0 // loop_pre_header
    _
  $region3: #{basic_conv_forward.1} parent=0 // loop_header
    %s9 = sphi 0, %s13
    %p10 = scmp.ge.s32.totalorder %s9, 4
    %s19 = sphi 0, %s21
    %s22 = sphi 0, %s19
    %s23 = sphi 0, %s22
    %s39 = sphi 0, %s23
    %s43 = sphi 0, %s43
    %s45 = sphi 0, %s43
    %s46 = sphi 0, %s45
    %s60 = sphi 0, %s46
    %s64 = sphi 0, %s64
    %s66 = sphi 0, %s64
    %s67 = sphi 0, %s66
    %s81 = sphi 0, %s67
    %s87 = sphi 0, %s89
    %s90 = sphi 0, %s87
    %s91 = sphi 0, %s90
    %s107 = sphi 0, %s91
  $region4: #{basic_conv_forward.1} parent=0 // loop_header_branch
    %12 = sbr.rel (%p10) target = $region8
  $region5: #{basic_conv_forward.1} parent=0 // loop_body
    %s14 = ssub.s32 %s9, 1
    %s15 = ssub.s32 %s9, 2
    %s16 = sadd.s32 %s9, 1
    %s17 = ssub.s32 %s9, %s16
    %p18 = scmp.eq.s32.totalorder %s17, 0
    %s20 = sadd.s32 %s19, 1
    %s21 = scalar_select %p18, %s19, %s20
    %p24 = pneg %p18
    %p25 = scmp.eq.s32.totalorder %s9, 1
    %p26 = por %p24, %p25
    %p27 = scmp.ne.s32.totalorder %s19, %s22
    %p28 = scmp.eq.s32.totalorder %s9, 0
    %p29 = por %p27, %p28
    %p30 = scmp.ne.s32.totalorder %s19, %s22
    %p31 = scmp.eq.s32.totalorder %s14, 1
    %p32 = por %p30, %p31
    %p33 = scmp.ne.s32.totalorder %s22, %s23
    %p34 = scmp.eq.s32.totalorder %s14, 0
    %p35 = por %p33, %p34
    %p36 = scmp.ne.s32.totalorder %s22, %s23
    %p37 = scmp.eq.s32.totalorder %s15, 1
    %p38 = por %p36, %p37
    %p40 = scmp.ne.s32.totalorder %s23, %s39
    %p41 = scmp.eq.s32.totalorder %s15, 0
    %p42 = por %p40, %p41
    %s44 = sadd.s32 %s43, 1
    %p47 = scmp.eq.s32.totalorder %s9, 1
    %p48 = scmp.ne.s32.totalorder %s43, %s45
    %p49 = scmp.eq.s32.totalorder %s9, 0
    %p50 = por %p48, %p49
    %p51 = scmp.ne.s32.totalorder %s43, %s45
    %p52 = scmp.eq.s32.totalorder %s14, 1
    %p53 = por %p51, %p52
    %p54 = scmp.ne.s32.totalorder %s45, %s46
    %p55 = scmp.eq.s32.totalorder %s14, 0
    %p56 = por %p54, %p55
    %p57 = scmp.ne.s32.totalorder %s45, %s46
    %p58 = scmp.eq.s32.totalorder %s15, 1
    %p59 = por %p57, %p58
    %p61 = scmp.ne.s32.totalorder %s46, %s60
    %p62 = scmp.eq.s32.totalorder %s15, 0
    %p63 = por %p61, %p62
    %s65 = sadd.s32 %s64, 1
    %p68 = scmp.eq.s32.totalorder %s9, 1
    %p69 = scmp.ne.s32.totalorder %s64, %s66
    %p70 = scmp.eq.s32.totalorder %s9, 0
    %p71 = por %p69, %p70
    %p72 = scmp.ne.s32.totalorder %s64, %s66
    %p73 = scmp.eq.s32.totalorder %s14, 1
    %p74 = por %p72, %p73
    %p75 = scmp.ne.s32.totalorder %s66, %s67
    %p76 = scmp.eq.s32.totalorder %s14, 0
    %p77 = por %p75, %p76
    %p78 = scmp.ne.s32.totalorder %s66, %s67
    %p79 = scmp.eq.s32.totalorder %s15, 1
    %p80 = por %p78, %p79
    %p82 = scmp.ne.s32.totalorder %s67, %s81
    %p83 = scmp.eq.s32.totalorder %s15, 0
    %p84 = por %p82, %p83
    %s85 = ssub.s32 %s9, %s16
    %p86 = scmp.eq.s32.totalorder %s85, 0
    %s88 = sadd.s32 %s87, 1
    %s89 = scalar_select %p86, %s87, %s88
    %p92 = pneg %p86
    %p93 = scmp.eq.s32.totalorder %s9, 1
    %p94 = por %p92, %p93
    %p95 = scmp.ne.s32.totalorder %s87, %s90
    %p96 = scmp.eq.s32.totalorder %s9, 0
    %p97 = por %p95, %p96
    %p98 = scmp.ne.s32.totalorder %s87, %s90
    %p99 = scmp.eq.s32.totalorder %s14, 1
    %p100 = por %p98, %p99
    %p101 = scmp.ne.s32.totalorder %s90, %s91
    %p102 = scmp.eq.s32.totalorder %s14, 0
    %p103 = por %p101, %p102
    %p104 = scmp.ne.s32.totalorder %s90, %s91
    %p105 = scmp.eq.s32.totalorder %s15, 1
    %p106 = por %p104, %p105
    %p108 = scmp.ne.s32.totalorder %s91, %s107
    %p109 = scmp.eq.s32.totalorder %s15, 0
    %p110 = por %p108, %p109
    %p111 = scmp.le.s32.totalorder 1, %s9
    %p112 = scmp.lt.s32.totalorder %s9, 3
    %p113 = pnand %p111, %p112
    %p114 = pneg %p113
    // Predicated region
    $region9: #{basic_conv_forward.1} parent=5 // pred_check
      _
    $region10: #{basic_conv_forward.1} parent=5 // pred_check_branch
      %116 = sbr.rel (%p113) target = $region12
    $region11: #{basic_conv_forward.1} parent=5 // pred_region
      %s117 = ssub.s32 %s9, 1
      // Predicated region
      $region13: #{basic_conv_forward.1} parent=11 // pred_check
        %p118 = pneg %p56
      $region14: #{basic_conv_forward.1} parent=11 // pred_check_branch
        %120 = sbr.rel (%p118) target = $region16
      $region15: #{basic_conv_forward.1} parent=11 // pred_region
        _
      $region16: #{basic_conv_forward.1} parent=11 // pred_fallthru
        _
      // Predicated region
      $region17: #{basic_conv_forward.1} parent=11 // pred_check
        %p121 = pneg %p77
      $region18: #{basic_conv_forward.1} parent=11 // pred_check_branch
        %123 = sbr.rel (%p121) target = $region20
      $region19: #{basic_conv_forward.1} parent=11 // pred_region
        _
      $region20: #{basic_conv_forward.1} parent=11 // pred_fallthru
        _
    $region12: #{basic_conv_forward.1} parent=5 // pred_fallthru
      _
    %p124 = scmp.lt.s32.totalorder %s9, 2
    // Predicated region
    $region21: #{basic_conv_forward.1} parent=5 // pred_check
      %p125 = pneg %p124
    $region22: #{basic_conv_forward.1} parent=5 // pred_check_branch
      %127 = sbr.rel (%p125) target = $region24
    $region23: #{basic_conv_forward.1} parent=5 // pred_region
      // Predicated region
      $region25: #{basic_conv_forward.1} parent=23 // pred_check
        %p128 = pneg %p29
      $region26: #{basic_conv_forward.1} parent=23 // pred_check_branch
        %130 = sbr.rel (%p128) target = $region28
      $region27: #{basic_conv_forward.1} parent=23 // pred_region
        %s131 = smul.u32 32, %s9
        %p132 = scmp.lt.s32.totalorder %s131, 63
        %s133 = scalar_select %p132, %s131, 63
        %s134 = smul.addr %s133, 4
        %s135 = scalar_lea.vmem %s0, %s134
        %s136 = smul.u32 32, %s9
      $region28: #{basic_conv_forward.1} parent=23 // pred_fallthru
        _
    $region24: #{basic_conv_forward.1} parent=5 // pred_fallthru
      _
    %p137 = scmp.le.s32.totalorder 1, %s9
    %p138 = scmp.lt.s32.totalorder %s9, 3
    %p139 = pnand %p137, %p138
    %p140 = pneg %p139
    // Predicated region
    $region29: #{basic_conv_forward.1} parent=5 // pred_check
      _
    $region30: #{basic_conv_forward.1} parent=5 // pred_check_branch
      %142 = sbr.rel (%p139) target = $region32
    $region31: #{basic_conv_forward.1} parent=5 // pred_region
      %s143 = ssub.s32 %s9, 1
      %s144 = smul.u32 32, %s14
      %p145 = scmp.lt.s32.totalorder %s144, 63
      %s146 = scalar_select %p145, %s144, 63
      %s147 = smul.addr %s146, 4
      %s148 = scalar_lea.vmem %s0, %s147
      %p149 = pneg %p35
      %p150 = pneg %p32
      %p151 = pneg %p56
      %p152 = pneg %p53
      %p153 = pneg %p77
      %p154 = pneg %p74
      %p155 = pneg %p103
      %p156 = pneg %p100
      %s157 = smul.u32 32, %s14
      %p158 = scmp.lt.s32.totalorder %s157, 63
      %s159 = scalar_select %p158, %s157, 63
      %s160 = smul.addr %s159, 8
      %s161 = scalar_lea.vmem %s3, %s160
      %s162 = smul.u32 32, %s14
      %p163 = scmp.lt.s32.totalorder %s162, 63
      %s164 = scalar_select %p163, %s162, 63
      %s165 = smul.addr %s164, 4
      %s166 = scalar_lea.vmem %s0, %s165
      %s167 = smul.u32 32, %s14
      %s168 = smul.u32 32, %s14
      %p169 = scmp.lt.s32.totalorder %s168, 63
      %s170 = scalar_select %p169, %s168, 63
      %s171 = smul.addr %s170, 8
      %s172 = scalar_lea.vmem %s3, %s171
      %s173 = smul.u32 32, %s14
      %v175 = vld [vmem:[%s166] sm:$0xf]
      %v176 = vld [vmem:[%s166 + $0x4] sm:$0xf]
      %v177 = vld [vmem:[%s166 + $0x8] sm:$0xf]
      %v178 = vld [vmem:[%s166 + $0xc] sm:$0xf]
      %v179 = vld [vmem:[%s166 + $0x10] sm:$0xf]
      %v180 = vld [vmem:[%s166 + $0x14] sm:$0xf]
      %v181 = vld [vmem:[%s166 + $0x18] sm:$0xf]
      %v182 = vld [vmem:[%s166 + $0x1c] sm:$0xf]
      %v183 = vld [vmem:[%s166 + $0x20] sm:$0xf]
      %v184 = vld [vmem:[%s166 + $0x24] sm:$0xf]
      %v185 = vld [vmem:[%s166 + $0x28] sm:$0xf]
      %v186 = vld [vmem:[%s166 + $0x2c] sm:$0xf]
      %v187 = vld [vmem:[%s166 + $0x30] sm:$0xf]
      %v188 = vld [vmem:[%s166 + $0x34] sm:$0xf]
      %v189 = vld [vmem:[%s166 + $0x38] sm:$0xf]
      %v190 = vld [vmem:[%s166 + $0x3c] sm:$0xf]
      %v191 = vld [vmem:[%s166 + $0x40] sm:$0xf]
      %v192 = vld [vmem:[%s166 + $0x44] sm:$0xf]
      %v193 = vld [vmem:[%s166 + $0x48] sm:$0xf]
      %v194 = vld [vmem:[%s166 + $0x4c] sm:$0xf]
      %v195 = vld [vmem:[%s166 + $0x50] sm:$0xf]
      %v196 = vld [vmem:[%s166 + $0x54] sm:$0xf]
      %v197 = vld [vmem:[%s166 + $0x58] sm:$0xf]
      %v198 = vld [vmem:[%s166 + $0x5c] sm:$0xf]
      %v199 = vld [vmem:[%s166 + $0x60] sm:$0xf]
      %v200 = vld [vmem:[%s166 + $0x64] sm:$0xf]
      %v201 = vld [vmem:[%s166 + $0x68] sm:$0xf]
      %v202 = vld [vmem:[%s166 + $0x6c] sm:$0xf]
      %v203 = vld [vmem:[%s166 + $0x70] sm:$0xf]
      %v204 = vld [vmem:[%s166 + $0x74] sm:$0xf]
      %v205 = vld [vmem:[%s166 + $0x78] sm:$0xf]
      %v206 = vld [vmem:[%s166 + $0x7c] sm:$0xf]
      %v207 = vld [vmem:[%s1] sm:$0xf]
      %v208 = vld [vmem:[%s1 + $0x4] sm:$0xf]
      %v209 = vld [vmem:[%s1 + $0x8] sm:$0xf]
      %v210 = vld [vmem:[%s1 + $0xc] sm:$0xf]
      %v211 = vld [vmem:[%s1 + $0x10] sm:$0x3]
      %v212 = vld [vmem:[%s2] sm:$0x1]
      %v214 = vlaneseq
      %v215 = vshrl.u32 %v214, 7
      %v216 = vsub.s32 0, %v215
      %v217 = vrot.slane %v212, %v216
      %v251 = vunpack.c.l.b16 %v175
      %v252 = vunpack.c.l.b16 %v176
      %v253 = vunpack.c.l.b16 %v177
      %v254 = vunpack.c.l.b16 %v178
      %v255 = vunpack.c.l.b16 %v179
      %v256 = vunpack.c.l.b16 %v180
      %v257 = vunpack.c.l.b16 %v181
      %v258 = vunpack.c.l.b16 %v182
      %v259 = vunpack.c.l.b16 %v183
      %v260 = vunpack.c.l.b16 %v184
      %v261 = vunpack.c.l.b16 %v185
      %v262 = vunpack.c.l.b16 %v186
      %v263 = vunpack.c.l.b16 %v187
      %v264 = vunpack.c.l.b16 %v188
      %v265 = vunpack.c.l.b16 %v189
      %v266 = vunpack.c.l.b16 %v190
      %v267 = vunpack.c.l.b16 %v191
      %v268 = vunpack.c.l.b16 %v192
      %v269 = vunpack.c.l.b16 %v193
      %v270 = vunpack.c.l.b16 %v194
      %v271 = vunpack.c.l.b16 %v195
      %v272 = vunpack.c.l.b16 %v196
      %v273 = vunpack.c.l.b16 %v197
      %v274 = vunpack.c.l.b16 %v198
      %v275 = vunpack.c.l.b16 %v199
      %v276 = vunpack.c.l.b16 %v200
      %v277 = vunpack.c.l.b16 %v201
      %v278 = vunpack.c.l.b16 %v202
      %v279 = vunpack.c.l.b16 %v203
      %v280 = vunpack.c.l.b16 %v204
      %v281 = vunpack.c.l.b16 %v205
      %v282 = vunpack.c.l.b16 %v206
      %v283 = vpack.c.b16 %v252, %v251
      %v284 = vpack.c.b16 %v254, %v253
      %v285 = vpack.c.b16 %v256, %v255
      %v286 = vpack.c.b16 %v258, %v257
      %v287 = vpack.c.b16 %v260, %v259
      %v288 = vpack.c.b16 %v262, %v261
      %v289 = vpack.c.b16 %v264, %v263
      %v290 = vpack.c.b16 %v266, %v265
      %v291 = vpack.c.b16 %v268, %v267
      %v292 = vpack.c.b16 %v270, %v269
      %v293 = vpack.c.b16 %v272, %v271
      %v294 = vpack.c.b16 %v274, %v273
      %v295 = vpack.c.b16 %v276, %v275
      %v296 = vpack.c.b16 %v278, %v277
      %v297 = vpack.c.b16 %v280, %v279
      %v298 = vpack.c.b16 %v282, %v281
      %v304 = vunpack.c.l.b16 %v207
      %v305 = vunpack.c.l.b16 %v208
      %v306 = vunpack.c.l.b16 %v209
      %v307 = vunpack.c.l.b16 %v210
      %v308 = vunpack.c.l.b16 %v211
      %v309 = vpack.c.b16 %v305, %v304
      %v310 = vpack.c.b16 %v307, %v306
      %v311 = vpack.c.b16 %v308, %v308
      %vm314 = vcmask 293888
      %v316 = vsel %vm314, %v283, 0
      %v319 = vsel %vm314, %v284, 0
      %v322 = vsel %vm314, %v285, 0
      %v325 = vsel %vm314, %v286, 0
      %v328 = vsel %vm314, %v287, 0
      %v331 = vsel %vm314, %v288, 0
      %v334 = vsel %vm314, %v289, 0
      %v337 = vsel %vm314, %v290, 0
      %v340 = vsel %vm314, %v291, 0
      %v343 = vsel %vm314, %v292, 0
      %v346 = vsel %vm314, %v293, 0
      %v349 = vsel %vm314, %v294, 0
      %v352 = vsel %vm314, %v295, 0
      %v355 = vsel %vm314, %v296, 0
      %v358 = vsel %vm314, %v297, 0
      %v361 = vsel %vm314, %v298, 0
      %vm363 = vcmask 1041408
      %v365 = vsel %vm363, %v311, 0
      %367 = vmatprep.subr.bf16.mxu0 0
      %368 = vmatpush1.bf16.msra.mxu0 %v309
      %369 = vmatprep.subr.bf16.mxu0 0
      %370 = vmatpush1.bf16.msra.mxu0 %v310
      %371 = vmatprep.subr.bf16.mxu0 0
      %372 = vmatpush1.bf16.msra.mxu0 %v365
      %373 = vmatprep.subr.bf16.mxu0 0
      %374 = vmatpush1.bf16.msra.mxu0 0
      %375 = vmatprep.subr.bf16.mxu0 0
      %376 = vmatpush1.bf16.msra.mxu0 0
      %377 = vmatprep.subr.bf16.mxu0 0
      %378 = vmatpush1.bf16.msra.mxu0 0
      %379 = vmatprep.subr.bf16.mxu0 0
      %380 = vmatpush1.bf16.msra.mxu0 0
      %381 = vmatprep.subr.bf16.mxu0 0
      %382 = vmatpush1.bf16.msra.mxu0 0
      %383 = vmatprep.subr.bf16.mxu0 0
      %384 = vmatpush1.bf16.msra.mxu0 0
      %385 = vmatprep.subr.bf16.mxu0 0
      %386 = vmatpush1.bf16.msra.mxu0 0
      %387 = vmatprep.subr.bf16.mxu0 0
      %388 = vmatpush1.bf16.msra.mxu0 0
      %389 = vmatprep.subr.bf16.mxu0 0
      %390 = vmatpush1.bf16.msra.mxu0 0
      %391 = vmatprep.subr.bf16.mxu0 0
      %392 = vmatpush1.bf16.msra.mxu0 0
      %393 = vmatprep.subr.bf16.mxu0 0
      %394 = vmatpush1.bf16.msra.mxu0 0
      %395 = vmatprep.subr.bf16.mxu0 0
      %396 = vmatpush1.bf16.msra.mxu0 0
      %397 = vmatprep.subr.bf16.mxu0 0
      %398 = vmatpush1.bf16.msra.mxu0 0
      %399 = vmatprep.mubr.bf16.mxu0 0
      %400 = vmatmul.mubr.bf16.gmra.mrb[0].mxu0 %v316
      %v401 = vpop.f32.mrb[0].mxu0
      %v402 = vadd.f32 %v217, %v401
      %v403 = vpop.f32.mrb[0].mxu0
      %v404 = vpop.f32.mrb[0].mxu0
      %v405 = vadd.f32 %v217, %v404
      %v406 = vpop.f32.mrb[0].mxu0
      %407 = vmatprep.mubr.bf16.mxu0 0
      %408 = vmatmul.mubr.bf16.gmra.mrb[0].mxu0 %v319
      %v409 = vpop.f32.mrb[0].mxu0
      %v410 = vadd.f32 %v217, %v409
      %v411 = vpop.f32.mrb[0].mxu0
      %v412 = vpop.f32.mrb[0].mxu0
      %v413 = vadd.f32 %v217, %v412
      %v414 = vpop.f32.mrb[0].mxu0
      %415 = vmatprep.mubr.bf16.mxu0 0
      %416 = vmatmul.mubr.bf16.gmra.mrb[0].mxu0 %v322
      %v417 = vpop.f32.mrb[0].mxu0
      %v418 = vadd.f32 %v217, %v417
      %v419 = vpop.f32.mrb[0].mxu0
      %v420 = vpop.f32.mrb[0].mxu0
      %v421 = vadd.f32 %v217, %v420
      %v422 = vpop.f32.mrb[0].mxu0
      %423 = vmatprep.mubr.bf16.mxu0 0
      %424 = vmatmul.mubr.bf16.gmra.mrb[0].mxu0 %v325
      %v425 = vpop.f32.mrb[0].mxu0
      %v426 = vadd.f32 %v217, %v425
      %v427 = vpop.f32.mrb[0].mxu0
      %v428 = vpop.f32.mrb[0].mxu0
      %v429 = vadd.f32 %v217, %v428
      %v430 = vpop.f32.mrb[0].mxu0
      %431 = vmatprep.mubr.bf16.mxu0 0
      %432 = vmatmul.mubr.bf16.gmra.mrb[0].mxu0 %v328
      %v433 = vpop.f32.mrb[0].mxu0
      %v434 = vadd.f32 %v217, %v433
      %v435 = vpop.f32.mrb[0].mxu0
      %v436 = vpop.f32.mrb[0].mxu0
      %v437 = vadd.f32 %v217, %v436
      %v438 = vpop.f32.mrb[0].mxu0
      %439 = vmatprep.mubr.bf16.mxu0 0
      %440 = vmatmul.mubr.bf16.gmra.mrb[0].mxu0 %v331
      %v441 = vpop.f32.mrb[0].mxu0
      %v442 = vadd.f32 %v217, %v441
      %v443 = vpop.f32.mrb[0].mxu0
      %v444 = vpop.f32.mrb[0].mxu0
      %v445 = vadd.f32 %v217, %v444
      %v446 = vpop.f32.mrb[0].mxu0
      %447 = vmatprep.mubr.bf16.mxu0 0
      %448 = vmatmul.mubr.bf16.gmra.mrb[0].mxu0 %v334
      %v449 = vpop.f32.mrb[0].mxu0
      %v450 = vadd.f32 %v217, %v449
      %v451 = vpop.f32.mrb[0].mxu0
      %v452 = vpop.f32.mrb[0].mxu0
      %v453 = vadd.f32 %v217, %v452
      %v454 = vpop.f32.mrb[0].mxu0
      %455 = vmatprep.mubr.bf16.mxu0 0
      %456 = vmatmul.mubr.bf16.gmra.mrb[0].mxu0 %v337
      %v457 = vpop.f32.mrb[0].mxu0
      %v458 = vadd.f32 %v217, %v457
      %v459 = vpop.f32.mrb[0].mxu0
      %v460 = vpop.f32.mrb[0].mxu0
      %v461 = vadd.f32 %v217, %v460
      %v462 = vpop.f32.mrb[0].mxu0
      %463 = vmatprep.mubr.bf16.mxu0 0
      %464 = vmatmul.mubr.bf16.gmra.mrb[0].mxu0 %v340
      %v465 = vpop.f32.mrb[0].mxu0
      %v466 = vadd.f32 %v217, %v465
      %v467 = vpop.f32.mrb[0].mxu0
      %v468 = vpop.f32.mrb[0].mxu0
      %v469 = vadd.f32 %v217, %v468
      %v470 = vpop.f32.mrb[0].mxu0
      %471 = vmatprep.mubr.bf16.mxu0 0
      %472 = vmatmul.mubr.bf16.gmra.mrb[0].mxu0 %v343
      %v473 = vpop.f32.mrb[0].mxu0
      %v474 = vadd.f32 %v217, %v473
      %v475 = vpop.f32.mrb[0].mxu0
      %v476 = vpop.f32.mrb[0].mxu0
      %v477 = vadd.f32 %v217, %v476
      %v478 = vpop.f32.mrb[0].mxu0
      %479 = vmatprep.mubr.bf16.mxu0 0
      %480 = vmatmul.mubr.bf16.gmra.mrb[0].mxu0 %v346
      %v481 = vpop.f32.mrb[0].mxu0
      %v482 = vadd.f32 %v217, %v481
      %v483 = vpop.f32.mrb[0].mxu0
      %v484 = vpop.f32.mrb[0].mxu0
      %v485 = vadd.f32 %v217, %v484
      %v486 = vpop.f32.mrb[0].mxu0
      %487 = vmatprep.mubr.bf16.mxu0 0
      %488 = vmatmul.mubr.bf16.gmra.mrb[0].mxu0 %v349
      %v489 = vpop.f32.mrb[0].mxu0
      %v490 = vadd.f32 %v217, %v489
      %v491 = vpop.f32.mrb[0].mxu0
      %v492 = vpop.f32.mrb[0].mxu0
      %v493 = vadd.f32 %v217, %v492
      %v494 = vpop.f32.mrb[0].mxu0
      %495 = vmatprep.mubr.bf16.mxu0 0
      %496 = vmatmul.mubr.bf16.gmra.mrb[0].mxu0 %v352
      %v497 = vpop.f32.mrb[0].mxu0
      %v498 = vadd.f32 %v217, %v497
      %v499 = vpop.f32.mrb[0].mxu0
      %v500 = vpop.f32.mrb[0].mxu0
      %v501 = vadd.f32 %v217, %v500
      %v502 = vpop.f32.mrb[0].mxu0
      %503 = vmatprep.mubr.bf16.mxu0 0
      %504 = vmatmul.mubr.bf16.gmra.mrb[0].mxu0 %v355
      %v505 = vpop.f32.mrb[0].mxu0
      %v506 = vadd.f32 %v217, %v505
      %v507 = vpop.f32.mrb[0].mxu0
      %v508 = vpop.f32.mrb[0].mxu0
      %v509 = vadd.f32 %v217, %v508
      %v510 = vpop.f32.mrb[0].mxu0
      %511 = vmatprep.mubr.bf16.mxu0 0
      %512 = vmatmul.mubr.bf16.gmra.mrb[0].mxu0 %v358
      %v513 = vpop.f32.mrb[0].mxu0
      %v514 = vadd.f32 %v217, %v513
      %v515 = vpop.f32.mrb[0].mxu0
      %v516 = vpop.f32.mrb[0].mxu0
      %v517 = vadd.f32 %v217, %v516
      %v518 = vpop.f32.mrb[0].mxu0
      %519 = vmatprep.mubr.bf16.mxu0 0
      %520 = vmatmul.mubr.bf16.gmra.mrb[0].mxu0 %v361
      %v521 = vpop.f32.mrb[0].mxu0
      %v522 = vadd.f32 %v217, %v521
      %v523 = vpop.f32.mrb[0].mxu0
      %v524 = vpop.f32.mrb[0].mxu0
      %v525 = vadd.f32 %v217, %v524
      %v526 = vpop.f32.mrb[0].mxu0
      %527 = vdwg.mxu0
      %v528 = vmax.f32 %v402, 0.0
      %v529 = vmax.f32 %v405, 0.0
      %v530 = vmax.f32 %v410, 0.0
      %v531 = vmax.f32 %v413, 0.0
      %v532 = vmax.f32 %v418, 0.0
      %v533 = vmax.f32 %v421, 0.0
      %v534 = vmax.f32 %v426, 0.0
      %v535 = vmax.f32 %v429, 0.0
      %v536 = vmax.f32 %v434, 0.0
      %v537 = vmax.f32 %v437, 0.0
      %v538 = vmax.f32 %v442, 0.0
      %v539 = vmax.f32 %v445, 0.0
      %v540 = vmax.f32 %v450, 0.0
      %v541 = vmax.f32 %v453, 0.0
      %v542 = vmax.f32 %v458, 0.0
      %v543 = vmax.f32 %v461, 0.0
      %v544 = vmax.f32 %v466, 0.0
      %v545 = vmax.f32 %v469, 0.0
      %v546 = vmax.f32 %v474, 0.0
      %v547 = vmax.f32 %v477, 0.0
      %v548 = vmax.f32 %v482, 0.0
      %v549 = vmax.f32 %v485, 0.0
      %v550 = vmax.f32 %v490, 0.0
      %v551 = vmax.f32 %v493, 0.0
      %v552 = vmax.f32 %v498, 0.0
      %v553 = vmax.f32 %v501, 0.0
      %v554 = vmax.f32 %v506, 0.0
      %v555 = vmax.f32 %v509, 0.0
      %v556 = vmax.f32 %v514, 0.0
      %v557 = vmax.f32 %v517, 0.0
      %v558 = vmax.f32 %v522, 0.0
      %v559 = vmax.f32 %v525, 0.0
      %560 = vst [vmem:[%s172] sm:$0xff] %v528
      %561 = vst [vmem:[%s172 + $0x8] sm:$0xff] %v529
      %562 = vst [vmem:[%s172 + $0x10] sm:$0xff] %v530
      %563 = vst [vmem:[%s172 + $0x18] sm:$0xff] %v531
      %564 = vst [vmem:[%s172 + $0x20] sm:$0xff] %v532
      %565 = vst [vmem:[%s172 + $0x28] sm:$0xff] %v533
      %566 = vst [vmem:[%s172 + $0x30] sm:$0xff] %v534
      %567 = vst [vmem:[%s172 + $0x38] sm:$0xff] %v535
      %568 = vst [vmem:[%s172 + $0x40] sm:$0xff] %v536
      %569 = vst [vmem:[%s172 + $0x48] sm:$0xff] %v537
      %570 = vst [vmem:[%s172 + $0x50] sm:$0xff] %v538
      %571 = vst [vmem:[%s172 + $0x58] sm:$0xff] %v539
      %572 = vst [vmem:[%s172 + $0x60] sm:$0xff] %v540
      %573 = vst [vmem:[%s172 + $0x68] sm:$0xff] %v541
      %574 = vst [vmem:[%s172 + $0x70] sm:$0xff] %v542
      %575 = vst [vmem:[%s172 + $0x78] sm:$0xff] %v543
      %576 = vst [vmem:[%s172 + $0x80] sm:$0xff] %v544
      %577 = vst [vmem:[%s172 + $0x88] sm:$0xff] %v545
      %578 = vst [vmem:[%s172 + $0x90] sm:$0xff] %v546
      %579 = vst [vmem:[%s172 + $0x98] sm:$0xff] %v547
      %580 = vst [vmem:[%s172 + $0xa0] sm:$0xff] %v548
      %581 = vst [vmem:[%s172 + $0xa8] sm:$0xff] %v549
      %582 = vst [vmem:[%s172 + $0xb0] sm:$0xff] %v550
      %583 = vst [vmem:[%s172 + $0xb8] sm:$0xff] %v551
      %584 = vst [vmem:[%s172 + $0xc0] sm:$0xff] %v552
      %585 = vst [vmem:[%s172 + $0xc8] sm:$0xff] %v553
      %586 = vst [vmem:[%s172 + $0xd0] sm:$0xff] %v554
      %587 = vst [vmem:[%s172 + $0xd8] sm:$0xff] %v555
      %588 = vst [vmem:[%s172 + $0xe0] sm:$0xff] %v556
      %589 = vst [vmem:[%s172 + $0xe8] sm:$0xff] %v557
      %590 = vst [vmem:[%s172 + $0xf0] sm:$0xff] %v558
      %591 = vst [vmem:[%s172 + $0xf8] sm:$0xff] %v559
      %s592 = smul.u32 32, %s14
      %p593 = scmp.lt.s32.totalorder %s592, 63
      %s594 = scalar_select %p593, %s592, 63
      %s595 = smul.addr %s594, 8
      %s596 = scalar_lea.vmem %s3, %s595
      // Predicated region
      $region33: #{basic_conv_forward.1} parent=31 // pred_check
        %p597 = pneg %p100
      $region34: #{basic_conv_forward.1} parent=31 // pred_check_branch
        %599 = sbr.rel (%p597) target = $region36
      $region35: #{basic_conv_forward.1} parent=31 // pred_region
        %s600 = smul.u32 32, %s14
      $region36: #{basic_conv_forward.1} parent=31 // pred_fallthru
        _
    $region32: #{basic_conv_forward.1} parent=5 // pred_fallthru
      _
    %p601 = scmp.le.s32.totalorder 2, %s9
    // Predicated region
    $region37: #{basic_conv_forward.1} parent=5 // pred_check
      %p602 = pneg %p601
    $region38: #{basic_conv_forward.1} parent=5 // pred_check_branch
      %604 = sbr.rel (%p602) target = $region40
    $region39: #{basic_conv_forward.1} parent=5 // pred_region
      %s605 = ssub.s32 %s9, 2
      // Predicated region
      $region41: #{basic_conv_forward.1} parent=39 // pred_check
        %p606 = pneg %p106
      $region42: #{basic_conv_forward.1} parent=39 // pred_check_branch
        %608 = sbr.rel (%p606) target = $region44
      $region43: #{basic_conv_forward.1} parent=39 // pred_region
        %s609 = smul.u32 32, %s15
        %p610 = scmp.lt.s32.totalorder %s609, 63
        %s611 = scalar_select %p610, %s609, 63
        %s612 = smul.addr %s611, 8
        %s613 = scalar_lea.vmem %s3, %s612
      $region44: #{basic_conv_forward.1} parent=39 // pred_fallthru
        _
    $region40: #{basic_conv_forward.1} parent=5 // pred_fallthru
      _
  $region6: #{basic_conv_forward.1} parent=0 // loop_footer
    %s13 = sadd.s32 1, %s9
  $region7: #{basic_conv_forward.1} parent=0 // loop_footer_branch
    %8 = sbr.rel target = $region3
  $region8: #{basic_conv_forward.1} parent=0 // loop_exit
    _

</llo_original>
